<compile_context>
chip_gen: v7x
topology: tpu7x:2x2x1
jax: 0.10.0
libtpu: 0.0.40
codegen_flags: <defaults>
</compile_context>

<pallas_src>
import math
import functools

import jax
import jax.numpy as jnp
from jax.experimental import pallas as pl
from jax.experimental.pallas import tpu as pltpu


def _make_pe(max_len: int, d_model: int) -> jnp.ndarray:
    """Build the sinusoidal positional-encoding table (max_len, d_model), matching PyTorch."""
    assert d_model % 2 == 0, "PositionalEncoding requires even d_model (PyTorch errors otherwise)"
    position = jnp.arange(0, max_len, dtype=jnp.float32)[:, None]            # (max_len, 1)
    div_term = jnp.exp(
        jnp.arange(0, d_model, 2, dtype=jnp.float32) * (-math.log(10000.0) / d_model)
    )                                                                         # (d/2,)
    angles = position * div_term                                              # (max_len, d/2)
    pe = jnp.zeros((max_len, d_model), dtype=jnp.float32)
    pe = pe.at[:, 0::2].set(jnp.sin(angles))
    pe = pe.at[:, 1::2].set(jnp.cos(angles))
    return pe


def _pe_add_kernel(x_ref, pe_ref, o_ref):
    # x_ref:  (TS, B*D) lane-dense tile of sequence rows
    # pe_ref: (1,  B*D) resident positional row (constant index_map)
    # o_ref:  (TS, B*D)
    o_ref[...] = x_ref[...] + pe_ref[...]        # (1, BD) broadcasts over TS rows


def _choose_tile_s(S: int, row_bytes: int) -> int:
    """Pick the sequence-tile size: large, multiple of 8 (sublane), VMEM-friendly."""
    if S <= 8:
        # Take the whole array in one block; block dim == full dim satisfies layout rules.
        return S
    # ~4 MiB blocks: hits the measured 85%+ of HBM roofline for tiled adds while
    # double-buffered in+out (~16 MiB) stays under every generation's scoped-VMEM budget.
    target_bytes = 4 * 1024 * 1024
    ts = max(8, min(S, target_bytes // max(row_bytes, 1)))
    ts = (ts // 8) * 8                            # sublane-aligned block rows
    if ts >= S:
        # Keep >= 2 grid chunks so both v7x TensorCores get a share of the sequence.
        ts = max(8, (((S + 1) // 2) // 8) * 8)
    return ts


@jax.jit
def positional_encoding_forward(x: jnp.ndarray, pe_full: jnp.ndarray) -> jnp.ndarray:
    """x: [S, B, D]; pe_full: [max_len, D]. Returns x + pe[:, :x.size(1)] (PyTorch semantics)."""
    S, B, D = x.shape
    BD = B * D

    # Glue (matches PyTorch `self.pe[:, :x.size(1)]`): slice pe along x's 2nd axis (batch),
    # cast to x.dtype up front so the kernel add has no per-step convert, and flatten to a
    # single lane-dense row.
    pe_row = pe_full[:B, :].astype(x.dtype).reshape(1, BD)    # (1, B*D)

    # Lane-dense 2-D view of x (free reshape; row-major contiguous).
    x2 = x.reshape(S, BD)

    ts = _choose_tile_s(S, BD * x.dtype.itemsize)
    grid = pl.cdiv(S, ts)

    out2 = pl.pallas_call(
        _pe_add_kernel,
        out_shape=jax.ShapeDtypeStruct((S, BD), x.dtype),
        grid_spec=pltpu.PrefetchScalarGridSpec(
            num_scalar_prefetch=0,
            grid=(grid,),
            in_specs=[
                pl.BlockSpec((ts, BD), lambda i: (i, 0)),     # x tile, full-width lanes
                pl.BlockSpec((1, BD), lambda i: (0, 0)),      # pe row, resident (const index)
            ],
            out_specs=pl.BlockSpec((ts, BD), lambda i: (i, 0)),
        ),
        compiler_params=pltpu.CompilerParams(
            dimension_semantics=("parallel",),
            # Explicit VMEM budget: safe on v7x (64 MiB physical) and lifts the lower
            # scoped defaults on v5e/v6e so the ~4 MiB double-buffered blocks always fit.
            vmem_limit_bytes=48 * 1024 * 1024,
        ),
    )(x2, pe_row)

    # TODO(synk): nn.Dropout(p=0.1) is identity in eval mode; train-mode dropout (random
    # mask + 1/(1-p) scale) is intentionally not applied to keep the forward deterministic.
    return out2.reshape(S, B, D)


if __name__ == "__main__":
    d_model = 32
    max_len = 200
    S, B, D = 8, 4, d_model   # [sequence length, batch size, embed dim]

    key = jax.random.PRNGKey(0)
    x = jax.random.normal(key, (S, B, D), dtype=jnp.float32)

    pe_full = _make_pe(max_len, d_model)

    out = positional_encoding_forward(x, pe_full)
    out = jax.block_until_ready(out)

    # Reference check (plain JAX, mirrors PyTorch eval-mode forward exactly).
    ref = x + pe_full[None, :B, :]
    assert out.shape == (S, B, D)
    assert jnp.allclose(out, ref, atol=1e-6, rtol=1e-6), "mismatch vs reference"

    print("KERNEL_OK")
</pallas_src>

<mosaic_0001>
module attributes {stable_mosaic.version = 11 : i64} {
  func.func @_pe_add_kernel(%arg0: i32, %arg1: memref<8x128xf32, #tpu.memory_space<vmem>>, %arg2: memref<1x128xf32, #tpu.memory_space<vmem>>, %arg3: memref<8x128xf32, #tpu.memory_space<vmem>>) attributes {dimension_semantics = [#tpu.dimension_semantics<parallel>], iteration_bounds = array<i64: 1>, scalar_prefetch = 0 : i64, scratch_operands = 0 : i64, tpu.core_type = #tpu.core_type<tc>, window_params = [{transform_indices = @transform_0, window_bounds = array<i64: 8, 128>}, {pipeline_mode = #tpu.pipeline_mode<synchronous>, transform_indices = @transform_1, window_bounds = array<i64: 1, 128>}, {transform_indices = @transform_2, window_bounds = array<i64: 8, 128>}]} {
    %c0 = arith.constant 0 : index
    %c0_0 = arith.constant 0 : index
    %0 = vector.load %arg1[%c0, %c0_0] : memref<8x128xf32, #tpu.memory_space<vmem>>, vector<8x128xf32>
    %c0_1 = arith.constant 0 : index
    %c0_2 = arith.constant 0 : index
    %1 = vector.load %arg2[%c0_1, %c0_2] : memref<1x128xf32, #tpu.memory_space<vmem>>, vector<1x128xf32>
    %2 = vector.broadcast %1 : vector<1x128xf32> to vector<8x128xf32>
    %3 = arith.addf %0, %2 : vector<8x128xf32>
    %c0_3 = arith.constant 0 : index
    %c0_4 = arith.constant 0 : index
    %4 = vector.load %arg3[%c0_3, %c0_4] : memref<8x128xf32, #tpu.memory_space<vmem>>, vector<8x128xf32>
    tpu.vector_store %arg3[%c0_3, %c0_4], %3 {strides = array<i32>} : memref<8x128xf32, #tpu.memory_space<vmem>>, vector<8x128xf32>,
    return
  }
  func.func @transform_0(%arg0: i32) -> (i32, i32) {
    %c0_i32 = arith.constant 0 : i32
    %c0_i32_0 = arith.constant 0 : i32
    return %arg0, %c0_i32 : i32, i32
  }
  func.func @transform_1(%arg0: i32) -> (i32, i32) {
    %c0_i32 = arith.constant 0 : i32
    %c0_i32_0 = arith.constant 0 : i32
    %c0_i32_1 = arith.constant 0 : i32
    return %c0_i32, %c0_i32_0 : i32, i32
  }
  func.func @transform_2(%arg0: i32) -> (i32, i32) {
    %c0_i32 = arith.constant 0 : i32
    %c0_i32_0 = arith.constant 0 : i32
    return %arg0, %c0_i32 : i32, i32
  }
}

</mosaic_0001>

<llo_original>
// kernel: positional_encoding_forward.1
$region0: #{positional_encoding_forward.1}
  #allocation0 [shape = 'u32[]', space=smem, size = 0x4, offset = 0x4, fixed_abs, tag = 'smem constant byte address 0x4 - core index']
  #allocation1 [shape = 'u32[144,128]{1,0:T(1,128)}', space=vmem, size = 0x12000, scoped, tag = 'internal scratch']
  %s0 = inlined_call_operand.vmem [shape: f32[8,128], index: 0, kind: input, shape index: {}]
  %s1 = inlined_call_operand.vmem [shape: f32[1,128], index: 1, kind: input, shape index: {}]
  %s2 = inlined_call_operand.vmem [shape: f32[8,128], index: 2, kind: output, shape index: {}]
  %s3 = sld [smem:[#allocation0]]
  $region18: #{positional_encoding_forward.1} parent=0
    _
  %s5 = ssub.s32 1, %s3
  %s6 = scalar_select 0, %s5, %s3
  // Predicated region
  $region2: #{positional_encoding_forward.1} parent=0 // pred_check
    _
  $region3: #{positional_encoding_forward.1} parent=0 // pred_check_branch
    %8 = sbr.rel (0) target = $region5
  $region4: #{positional_encoding_forward.1} parent=0 // pred_region
    _
  $region5: #{positional_encoding_forward.1} parent=0 // pred_fallthru
    _
  // Predicated region
  $region6: #{positional_encoding_forward.1} parent=0 // pred_check
    _
  $region7: #{positional_encoding_forward.1} parent=0 // pred_check_branch
    %10 = sbr.rel (0) target = $region9
  $region8: #{positional_encoding_forward.1} parent=0 // pred_region
    _
  $region9: #{positional_encoding_forward.1} parent=0 // pred_fallthru
    _
  %v11 = vld [vmem:[%s0] sm:$0xff]
  %v12 = vld [vmem:[%s1] sm:$0x1]
  %v14 = vlaneseq
  %v15 = vshrl.u32 %v14, 7
  %v16 = vsub.s32 0, %v15
  %v17 = vrot.slane %v12, %v16
  %v19 = vadd.f32 %v11, %v17
  %20 = vst [vmem:[%s2] sm:$0xff] %v19
  // Predicated region
  $region10: #{positional_encoding_forward.1} parent=0 // pred_check
    _
  $region11: #{positional_encoding_forward.1} parent=0 // pred_check_branch
    %22 = sbr.rel (0) target = $region13
  $region12: #{positional_encoding_forward.1} parent=0 // pred_region
    _
  $region13: #{positional_encoding_forward.1} parent=0 // pred_fallthru
    _
  // Predicated region
  $region14: #{positional_encoding_forward.1} parent=0 // pred_check
    _
  $region15: #{positional_encoding_forward.1} parent=0 // pred_check_branch
    %24 = sbr.rel (0) target = $region17
  $region16: #{positional_encoding_forward.1} parent=0 // pred_region
    _
  $region17: #{positional_encoding_forward.1} parent=0 // pred_fallthru
    _

</llo_original>
